<compile_context>
chip_gen: v7x
topology: tpu7x:2x2x1
jax: 0.10.0
libtpu: 0.0.40
codegen_flags: <defaults>
</compile_context>

<pallas_src>
import jax
import jax.numpy as jnp
from jax.experimental import pallas as pl
from jax.experimental.pallas import tpu as pltpu

EPS = 1e-5


def _round_up(x, m):
    return (x + m - 1) // m * m


def _cdiv(a, b):
    return (a + b - 1) // b


# ----------------------------- Pallas kernels ------------------------------

def _conv_y_stats_kernel(p_ref, w_ref, y_ref, sum_ref, sumsq_ref):
    """Pass 1: conv GEMM tile -> y tile to HBM + per-channel sum / sum-of-squares.

    p_ref:     (TM, Kp)  bf16 im2col tile
    w_ref:     (Kp, OCp) bf16 reshaped conv weight (grid-invariant)
    y_ref:     (TM, OCp) bf16 conv output tile (streamed to HBM, read by pass 2)
    sum_ref:   (8, OCp)  f32 per-core per-channel sums   (resident accumulator)
    sumsq_ref: (8, OCp)  f32 per-core per-channel sumsqs (resident accumulator)
    """
    @pl.when(pl.program_id(1) == 0)
    def _init():
        sum_ref[...] = jnp.zeros_like(sum_ref)
        sumsq_ref[...] = jnp.zeros_like(sumsq_ref)

    y = jnp.dot(p_ref[...], w_ref[...], preferred_element_type=jnp.float32)
    y_q = y.astype(y_ref.dtype)
    y_ref[...] = y_q

    # Stats are taken from the values actually stored (quantized), so the pass-2
    # normalization is exactly the batch-norm of the data it is applied to.
    # NOTE: single-pass E[y^2]-E[y]^2 in f32 (clamped in the wrapper); switch to a
    # centered second pass if stats drift on very large M with |mean| >> std.
    y32 = y_q.astype(jnp.float32)
    yr = y32.reshape(-1, 8, y32.shape[-1])          # (TM//8, 8, OCp), TM % 16 == 0
    sum_ref[...] += jnp.sum(yr, axis=0)
    sumsq_ref[...] += jnp.sum(yr * yr, axis=0)


def _bn_relu6_kernel(y_ref, scale_ref, bias_ref, o_ref):
    """Pass 2: elementwise BN affine (precomputed per-channel scale/bias) + ReLU6."""
    y = y_ref[...].astype(jnp.float32)
    y = y * scale_ref[...] + bias_ref[...]
    o_ref[...] = jnp.clip(y, 0.0, 6.0).astype(o_ref.dtype)


# ------------------------------- wrapper ------------------------------------

def basic_conv(x, weight_oihw, gamma, beta, *, stride=1, padding=1,
               tile_m=512, compute_dtype=jnp.bfloat16, out_dtype=jnp.float32,
               x_format="NCHW", out_format="NCHW"):
    """Conv2d(bias=False) + BatchNorm2d(train) + ReLU6, matching PyTorch BasicConv."""
    assert tile_m % 16 == 0, "tile_m must be a multiple of 16 (bf16 sublane tile)"

    if x_format == "NCHW":
        x_nhwc = jnp.transpose(x, (0, 2, 3, 1))
    else:                                   # caller already NHWC (skips 2 transposes)
        x_nhwc = x
    N, H, W, C = x_nhwc.shape
    OC, Cw, KH, KW = weight_oihw.shape
    assert Cw == C
    OH = (H + 2 * padding - KH) // stride + 1
    OW = (W + 2 * padding - KW) // stride + 1
    M = N * OH * OW
    K = KH * KW * C

    # Lane-dense padding of the contraction / channel dims.
    Kp = _round_up(K, 128)
    OCp = _round_up(OC, 128)

    # Row tiling: pick #tiles first, then the smallest 16-aligned TM covering M,
    # so M padding stays small; nt even so pass 1 splits across two v7x cores.
    nt = _round_up(max(1, _cdiv(M, tile_m)), 2)
    TM = _round_up(_cdiv(M, nt), 16)
    Mp = TM * nt
    nt2 = nt // 2

    # ---- glue: NHWC (cast to bf16 BEFORE pad/im2col), zero-pad to (Mp, Kp) ----
    xp = jnp.pad(x_nhwc.astype(compute_dtype),
                 ((0, 0), (padding, padding), (padding, padding), (0, 0)))
    patch_list = []
    for kh in range(KH):
        for kw in range(KW):
            patch_list.append(
                xp[:, kh:kh + (OH - 1) * stride + 1:stride,
                      kw:kw + (OW - 1) * stride + 1:stride, :])
    # ordering (kh, kw, c) with c fastest, matching the weight reshape below.
    patches = jnp.concatenate(patch_list, axis=-1).reshape(M, K)
    patches = jnp.pad(patches, ((0, Mp - M), (0, Kp - K)))

    # weight (OC, C, KH, KW) -> (KH, KW, C, OC) -> (K, OC) -> pad to (Kp, OCp)
    w2d = jnp.transpose(weight_oihw.astype(compute_dtype), (2, 3, 1, 0)).reshape(K, OC)
    w2d = jnp.pad(w2d, ((0, Kp - K), (0, OCp - OC)))

    in_bpe = jnp.dtype(compute_dtype).itemsize
    cost1 = pl.CostEstimate(
        flops=2 * Mp * Kp * OCp + 4 * Mp * OCp,
        transcendentals=0,
        bytes_accessed=(Mp * Kp * in_bpe + Kp * OCp * in_bpe
                        + Mp * OCp * in_bpe + 2 * 16 * OCp * 4),
    )

    # ---- pass 1: conv GEMM (once) -> y + per-channel batch sum / sumsq ----
    y2d, sums, sumsqs = pl.pallas_call(
        _conv_y_stats_kernel,
        out_shape=(
            jax.ShapeDtypeStruct((Mp, OCp), compute_dtype),   # conv output y
            jax.ShapeDtypeStruct((16, OCp), jnp.float32),     # 2 cores x 8 sublanes
            jax.ShapeDtypeStruct((16, OCp), jnp.float32),
        ),
        grid=(2, nt2),
        in_specs=[
            pl.BlockSpec((TM, Kp), lambda c, i: (c * nt2 + i, 0)),
            pl.BlockSpec((Kp, OCp), lambda c, i: (0, 0)),
        ],
        out_specs=(
            pl.BlockSpec((TM, OCp), lambda c, i: (c * nt2 + i, 0)),
            pl.BlockSpec((8, OCp), lambda c, i: (c, 0)),
            pl.BlockSpec((8, OCp), lambda c, i: (c, 0)),
        ),
        compiler_params=pltpu.CompilerParams(
            dimension_semantics=("parallel", "arbitrary"),
            vmem_limit_bytes=64 * 1024 * 1024),
        cost_estimate=cost1,
    )(patches, w2d)

    # Tiny per-channel glue (f32): combine core/sublane partials, batch mean /
    # biased variance over the true M, fused BN scale & bias.
    count = jnp.float32(M)                       # true (unpadded) N*OH*OW
    sum_c = jnp.sum(sums, axis=0)                # (OCp,)
    sumsq_c = jnp.sum(sumsqs, axis=0)
    mean = sum_c / count
    var = jnp.maximum(sumsq_c / count - mean * mean, 0.0)
    inv = jax.lax.rsqrt(var + EPS)
    gamma_p = jnp.pad(gamma.astype(jnp.float32), (0, OCp - OC))
    beta_p = jnp.pad(beta.astype(jnp.float32), (0, OCp - OC))
    scale = (gamma_p * inv).reshape(1, OCp)
    bias = (beta_p - mean * gamma_p * inv).reshape(1, OCp)

    out_bpe = jnp.dtype(out_dtype).itemsize
    cost2 = pl.CostEstimate(
        flops=4 * Mp * OCp,
        transcendentals=0,
        bytes_accessed=Mp * OCp * in_bpe + 2 * OCp * 4 + Mp * OCp * out_bpe,
    )

    # ---- pass 2: elementwise BN affine + ReLU6 over y, tiled over M (parallel) ----
    out2d = pl.pallas_call(
        _bn_relu6_kernel,
        out_shape=jax.ShapeDtypeStruct((Mp, OCp), out_dtype),
        grid=(nt,),
        in_specs=[
            pl.BlockSpec((TM, OCp), lambda i: (i, 0)),
            pl.BlockSpec((1, OCp), lambda i: (0, 0)),
            pl.BlockSpec((1, OCp), lambda i: (0, 0)),
        ],
        out_specs=pl.BlockSpec((TM, OCp), lambda i: (i, 0)),
        compiler_params=pltpu.CompilerParams(
            dimension_semantics=("parallel",),
            vmem_limit_bytes=64 * 1024 * 1024),
        cost_estimate=cost2,
    )(y2d, scale, bias)

    # (Mp, OCp) -> true rows/channels -> (N, OH, OW, OC) [-> NCHW]
    out = out2d[:M, :OC].reshape(N, OH, OW, OC)
    if out_format == "NCHW":
        out = jnp.transpose(out, (0, 3, 1, 2))
    return out


# ------------------------------ reference -----------------------------------

def _reference(x_nchw, weight_oihw, gamma, beta, *, stride=1, padding=1,
               compute_dtype=jnp.float32, quantize_y=False):
    """Pure-JAX reference mirroring PyTorch semantics (optionally bf16-quantized)."""
    y = jax.lax.conv_general_dilated(
        x_nchw.astype(compute_dtype), weight_oihw.astype(compute_dtype),
        window_strides=(stride, stride),
        padding=[(padding, padding), (padding, padding)],
        dimension_numbers=("NCHW", "OIHW", "NCHW"),
        preferred_element_type=jnp.float32,
    )
    if quantize_y:
        y = y.astype(jnp.bfloat16).astype(jnp.float32)
    mean = jnp.mean(y, axis=(0, 2, 3), keepdims=True)
    var = jnp.mean((y - mean) ** 2, axis=(0, 2, 3), keepdims=True)
    y = (y - mean) * jax.lax.rsqrt(var + EPS)
    y = y * gamma.reshape(1, -1, 1, 1) + beta.reshape(1, -1, 1, 1)
    return jnp.clip(y, 0.0, 6.0)


if __name__ == "__main__":
    # BasicConv(in_planes=4, out_planes=8, kernel_size=3, stride=1, padding=1,
    #           relu=True, bn=True, bias=False)
    N, C, H, W = 2, 4, 16, 16
    OC, KH, KW = 8, 3, 3
    stride, padding = 1, 1

    key = jax.random.PRNGKey(0)
    kx, kw_, kg, kb = jax.random.split(key, 4)
    x = jax.random.normal(kx, (N, C, H, W), dtype=jnp.float32)
    weight = jax.random.normal(kw_, (OC, C, KH, KW), dtype=jnp.float32) * 0.1
    gamma = 1.0 + 0.1 * jax.random.normal(kg, (OC,), dtype=jnp.float32)
    beta = 0.1 * jax.random.normal(kb, (OC,), dtype=jnp.float32)

    out = basic_conv(x, weight, gamma, beta, stride=stride, padding=padding)
    out = jax.block_until_ready(out)
    assert out.shape == (N, OC, H, W), out.shape

    # Tight check vs a reference that applies the same bf16 quantization of the conv
    # inputs and of the stored conv output (kernel mechanics: conv, batch BN, ReLU6).
    ref_q = _reference(x, weight, gamma, beta, stride=stride, padding=padding,
                       compute_dtype=jnp.bfloat16, quantize_y=True)
    assert jnp.allclose(out, ref_q, atol=3e-3, rtol=3e-3), \
        float(jnp.max(jnp.abs(out - ref_q)))

    # Looser check vs the full-f32 PyTorch-equivalent reference (bf16 matmul inputs /
    # y storage introduce ~1e-2-level deviations; BN renormalization absorbs most).
    ref_f32 = _reference(x, weight, gamma, beta, stride=stride, padding=padding,
                         compute_dtype=jnp.float32)
    assert jnp.allclose(out, ref_f32, atol=5e-2, rtol=5e-2), \
        float(jnp.max(jnp.abs(out - ref_f32)))

    print("KERNEL_OK")
</pallas_src>

<mosaic_0001>
module attributes {stable_mosaic.version = 11 : i64} {
  func.func @_conv_y_stats_kernel(%arg0: i32, %arg1: i32, %arg2: memref<256x128xbf16, #tpu.memory_space<vmem>>, %arg3: memref<128x128xbf16, #tpu.memory_space<vmem>>, %arg4: memref<256x128xbf16, #tpu.memory_space<vmem>>, %arg5: memref<8x128xf32, #tpu.memory_space<vmem>>, %arg6: memref<8x128xf32, #tpu.memory_space<vmem>>) attributes {dimension_semantics = [#tpu.dimension_semantics<parallel>, #tpu.dimension_semantics<arbitrary>], iteration_bounds = array<i64: 2, 1>, scalar_prefetch = 0 : i64, scratch_operands = 0 : i64, tpu.core_type = #tpu.core_type<tc>, window_params = [{transform_indices = @transform_0, window_bounds = array<i64: 256, 128>}, {pipeline_mode = #tpu.pipeline_mode<synchronous>, transform_indices = @transform_1, window_bounds = array<i64: 128, 128>}, {transform_indices = @transform_2, window_bounds = array<i64: 256, 128>}, {transform_indices = @transform_3, window_bounds = array<i64: 8, 128>}, {transform_indices = @transform_4, window_bounds = array<i64: 8, 128>}]} {
    %c0_i32 = arith.constant 0 : i32
    %0 = arith.cmpi eq, %arg1, %c0_i32 : i32
    %1 = arith.extui %0 : i1 to i32
    %c0_i32_0 = arith.constant 0 : i32
    %2 = arith.cmpi ne, %1, %c0_i32_0 : i32
    scf.if %2 {
      %cst_16 = arith.constant 0.000000e+00 : f32
      %19 = vector.broadcast %cst_16 : f32 to vector<8x128xf32>
      %c0_17 = arith.constant 0 : index
      %c0_18 = arith.constant 0 : index
      %20 = vector.load %arg5[%c0_17, %c0_18] : memref<8x128xf32, #tpu.memory_space<vmem>>, vector<8x128xf32>
      tpu.vector_store %arg5[%c0_17, %c0_18], %19 {strides = array<i32>} : memref<8x128xf32, #tpu.memory_space<vmem>>, vector<8x128xf32>,
      %cst_19 = arith.constant 0.000000e+00 : f32
      %21 = vector.broadcast %cst_19 : f32 to vector<8x128xf32>
      %c0_20 = arith.constant 0 : index
      %c0_21 = arith.constant 0 : index
      %22 = vector.load %arg6[%c0_20, %c0_21] : memref<8x128xf32, #tpu.memory_space<vmem>>, vector<8x128xf32>
      tpu.vector_store %arg6[%c0_20, %c0_21], %21 {strides = array<i32>} : memref<8x128xf32, #tpu.memory_space<vmem>>, vector<8x128xf32>,
    } else {
    }
    %c0 = arith.constant 0 : index
    %c0_1 = arith.constant 0 : index
    %3 = vector.load %arg2[%c0, %c0_1] : memref<256x128xbf16, #tpu.memory_space<vmem>>, vector<256x128xbf16>
    %c0_2 = arith.constant 0 : index
    %c0_3 = arith.constant 0 : index
    %4 = vector.load %arg3[%c0_2, %c0_3] : memref<128x128xbf16, #tpu.memory_space<vmem>>, vector<128x128xbf16>
    %cst = arith.constant dense<0.000000e+00> : vector<256x128xf32>
    %5 = tpu.matmul %3, %4, %cst {dimension_numbers = #tpu.dot_dimension_numbers<[1], [0], [0], [1], [0, 0, 1, 1], [], []>} : vector<256x128xbf16>, vector<128x128xbf16>, vector<256x128xf32> -> vector<256x128xf32>
    %6 = arith.truncf %5 : vector<256x128xf32> to vector<256x128xbf16>
    %c0_4 = arith.constant 0 : index
    %c0_5 = arith.constant 0 : index
    %7 = vector.load %arg4[%c0_4, %c0_5] : memref<256x128xbf16, #tpu.memory_space<vmem>>, vector<256x128xbf16>
    tpu.vector_store %arg4[%c0_4, %c0_5], %6 {strides = array<i32>} : memref<256x128xbf16, #tpu.memory_space<vmem>>, vector<256x128xbf16>,
    %8 = arith.extf %6 : vector<256x128xbf16> to vector<256x128xf32>
    %9 = vector.shape_cast %8 : vector<256x128xf32> to vector<32x8x128xf32>
    %c0_6 = arith.constant 0 : index
    %c0_7 = arith.constant 0 : index
    %10 = vector.load %arg5[%c0_6, %c0_7] : memref<8x128xf32, #tpu.memory_space<vmem>>, vector<8x128xf32>
    %cst_8 = arith.constant dense<0.000000e+00> : vector<8x128xf32>
    %11 = vector.multi_reduction <add>, %9, %cst_8 [0] : vector<32x8x128xf32> to vector<8x128xf32>
    %12 = arith.addf %10, %11 : vector<8x128xf32>
    %c0_9 = arith.constant 0 : index
    %c0_10 = arith.constant 0 : index
    %13 = vector.load %arg5[%c0_9, %c0_10] : memref<8x128xf32, #tpu.memory_space<vmem>>, vector<8x128xf32>
    tpu.vector_store %arg5[%c0_9, %c0_10], %12 {strides = array<i32>} : memref<8x128xf32, #tpu.memory_space<vmem>>, vector<8x128xf32>,
    %c0_11 = arith.constant 0 : index
    %c0_12 = arith.constant 0 : index
    %14 = vector.load %arg6[%c0_11, %c0_12] : memref<8x128xf32, #tpu.memory_space<vmem>>, vector<8x128xf32>
    %15 = arith.mulf %9, %9 : vector<32x8x128xf32>
    %cst_13 = arith.constant dense<0.000000e+00> : vector<8x128xf32>
    %16 = vector.multi_reduction <add>, %15, %cst_13 [0] : vector<32x8x128xf32> to vector<8x128xf32>
    %17 = arith.addf %14, %16 : vector<8x128xf32>
    %c0_14 = arith.constant 0 : index
    %c0_15 = arith.constant 0 : index
    %18 = vector.load %arg6[%c0_14, %c0_15] : memref<8x128xf32, #tpu.memory_space<vmem>>, vector<8x128xf32>
    tpu.vector_store %arg6[%c0_14, %c0_15], %17 {strides = array<i32>} : memref<8x128xf32, #tpu.memory_space<vmem>>, vector<8x128xf32>,
    return
  }
  func.func @transform_0(%arg0: i32, %arg1: i32) -> (i32, i32) {
    %c1_i32 = arith.constant 1 : i32
    %0 = arith.muli %arg0, %c1_i32 : i32
    %1 = arith.addi %0, %arg1 : i32
    %c0_i32 = arith.constant 0 : i32
    %c0_i32_0 = arith.constant 0 : i32
    return %1, %c0_i32 : i32, i32
  }
  func.func @transform_1(%arg0: i32, %arg1: i32) -> (i32, i32) {
    %c0_i32 = arith.constant 0 : i32
    %c0_i32_0 = arith.constant 0 : i32
    %c0_i32_1 = arith.constant 0 : i32
    return %c0_i32, %c0_i32_0 : i32, i32
  }
  func.func @transform_2(%arg0: i32, %arg1: i32) -> (i32, i32) {
    %c1_i32 = arith.constant 1 : i32
    %0 = arith.muli %arg0, %c1_i32 : i32
    %1 = arith.addi %0, %arg1 : i32
    %c0_i32 = arith.constant 0 : i32
    %c0_i32_0 = arith.constant 0 : i32
    return %1, %c0_i32 : i32, i32
  }
  func.func @transform_3(%arg0: i32, %arg1: i32) -> (i32, i32) {
    %c0_i32 = arith.constant 0 : i32
    %c0_i32_0 = arith.constant 0 : i32
    return %arg0, %c0_i32 : i32, i32
  }
  func.func @transform_4(%arg0: i32, %arg1: i32) -> (i32, i32) {
    %c0_i32 = arith.constant 0 : i32
    %c0_i32_0 = arith.constant 0 : i32
    return %arg0, %c0_i32 : i32, i32
  }
}

</mosaic_0001>

<llo_original>
// kernel: tpu_custom_call.1
$region0: #{tpu_custom_call.1}
  #allocation0 [shape = 'u32[]', space=smem, size = 0x4, offset = 0x4, fixed_abs, tag = 'smem constant byte address 0x4 - core index']
  #allocation1 [shape = 'u32[144,128]{1,0:T(1,128)}', space=vmem, size = 0x12000, scoped, tag = 'internal scratch']
  %s0 = inlined_call_operand.hbm [shape: bf16[512,128], index: 0, kind: input, shape index: {}]
  %s1 = inlined_call_operand.hbm [shape: bf16[128,128], index: 1, kind: input, shape index: {}]
  %s2 = inlined_call_operand.hbm [shape: bf16[512,128], index: 2, kind: output, shape index: {0}]
  %s3 = inlined_call_operand.hbm [shape: f32[16,128], index: 3, kind: output, shape index: {1}]
  %s4 = inlined_call_operand.hbm [shape: f32[16,128], index: 4, kind: output, shape index: {2}]
  %5 = xla_tuple %s2, %s3, %s4
  %s6 = sld [smem:[#allocation0]]
  $region69: #{tpu_custom_call.1} parent=0
    _
  %s8 = ssub.s32 1, %s6
  %s9 = scalar_select 0, %s8, %s6
  $region1: #{tpu_custom_call.1} parent=0
    #allocation2 [shape = 'u8[131072]{0}', space=vmem, size = 0x20000, scoped, tag = 'input window, operand 0']
    #allocation3 [shape = 's32[2]{0}', space=sflag, size = 0x8, scoped, tag = 'scoped memory for tpu_custom_call.1']
    #allocation4 [shape = 's32[2]{0}', space=sflag, size = 0x8, scoped, tag = 'scoped memory for tpu_custom_call.1']
    #allocation5 [shape = 'u8[32768]{0}', space=vmem, size = 0x8000, scoped, tag = 'input window, operand 1, single buffered']
    #allocation6 [shape = 's32[1]{0}', space=sflag, size = 0x4, scoped, tag = 'scoped memory for tpu_custom_call.1']
    #allocation7 [shape = 'u8[131072]{0}', space=vmem, size = 0x20000, scoped, tag = 'output window, operand 0']
    #allocation8 [shape = 'u8[8192]{0}', space=vmem, size = 0x2000, scoped, tag = 'output window, operand 1']
    #allocation9 [shape = 's32[2]{0}', space=sflag, size = 0x8, scoped, tag = 'scoped memory for tpu_custom_call.1']
    #allocation10 [shape = 'u8[8192]{0}', space=vmem, size = 0x2000, scoped, tag = 'output window, operand 2']
    %10 = vsyncpa [#allocation3], 0
    %s11 = scalar_lea.sflag [#allocation3], 1
    %12 = vsyncpa %s11, 0
    %13 = vsyncpa [#allocation6], 0
    %14 = vsyncpa [#allocation4], 0
    %s15 = scalar_lea.sflag [#allocation4], 1
    %16 = vsyncpa %s15, 0
    %17 = vsyncpa [#allocation9], 0
    %s18 = scalar_lea.sflag [#allocation9], 1
    %19 = vsyncpa %s18, 0
    loop: start=0, step=1, limit=4
    $region2: #{tpu_custom_call.1} parent=1 // loop_pre_header
      _
    $region3: #{tpu_custom_call.1} parent=1 // loop_header
      %s21 = sphi 0, %s25
      %p22 = scmp.ge.s32.totalorder %s21, 4
      %s28 = sphi 0, %s40
      %s29 = sphi 0, %s36
      %s30 = sphi 0, %s28
      %s31 = sphi 0, %s29
      %s32 = sphi 0, %s30
      %s33 = sphi 0, %s31
      %s45 = sphi 0, %s47
      %s48 = sphi 0, %s45
      %s49 = sphi 0, %s48
      %s65 = sphi 0, %s49
      %s69 = sphi 0, %s69
      %s71 = sphi 0, %s69
      %s72 = sphi 0, %s71
      %s86 = sphi 0, %s72
      %s94 = sphi 0, %s96
      %s97 = sphi 0, %s94
      %s98 = sphi 0, %s97
      %s114 = sphi 0, %s98
      %s120 = sphi 0, %s122
      %s123 = sphi 0, %s120
      %s124 = sphi 0, %s123
      %s140 = sphi 0, %s124
      %s146 = sphi 0, %s148
      %s149 = sphi 0, %s146
      %s150 = sphi 0, %s149
      %s166 = sphi 0, %s150
    $region4: #{tpu_custom_call.1} parent=1 // loop_header_branch
      %24 = sbr.rel (%p22) target = $region8
    $region5: #{tpu_custom_call.1} parent=1 // loop_body
      %s26 = ssub.s32 %s21, 1
      %s27 = ssub.s32 %s21, 2
      %s34 = sadd.s32 1, %s29
      %p35 = scmp.ge.s32.totalorder %s34, 1
      %s36 = scalar_select %p35, 0, %s34
      %s37 = sadd.s32 1, %s28
      %s38 = scalar_select %p35, %s37, %s28
      %p39 = scmp.ge.s32.totalorder %s38, 2
      %s40 = scalar_select %p39, 0, %s38
      %s41 = sadd.s32 %s28, %s29
      %s42 = sadd.s32 %s40, %s36
      %s43 = ssub.s32 %s41, %s42
      %p44 = scmp.eq.s32.totalorder %s43, 0
      %s46 = sadd.s32 %s45, 1
      %s47 = scalar_select %p44, %s45, %s46
      %p50 = pneg %p44
      %p51 = scmp.eq.s32.totalorder %s21, 1
      %p52 = por %p50, %p51
      %p53 = scmp.ne.s32.totalorder %s45, %s48
      %p54 = scmp.eq.s32.totalorder %s21, 0
      %p55 = por %p53, %p54
      %p56 = scmp.ne.s32.totalorder %s45, %s48
      %p57 = scmp.eq.s32.totalorder %s26, 1
      %p58 = por %p56, %p57
      %p59 = scmp.ne.s32.totalorder %s48, %s49
      %p60 = scmp.eq.s32.totalorder %s26, 0
      %p61 = por %p59, %p60
      %p62 = scmp.ne.s32.totalorder %s48, %s49
      %p63 = scmp.eq.s32.totalorder %s27, 1
      %p64 = por %p62, %p63
      %p66 = scmp.ne.s32.totalorder %s49, %s65
      %p67 = scmp.eq.s32.totalorder %s27, 0
      %p68 = por %p66, %p67
      %s70 = sadd.s32 %s69, 1
      %p73 = scmp.eq.s32.totalorder %s21, 1
      %p74 = scmp.ne.s32.totalorder %s69, %s71
      %p75 = scmp.eq.s32.totalorder %s21, 0
      %p76 = por %p74, %p75
      %p77 = scmp.ne.s32.totalorder %s69, %s71
      %p78 = scmp.eq.s32.totalorder %s26, 1
      %p79 = por %p77, %p78
      %p80 = scmp.ne.s32.totalorder %s71, %s72
      %p81 = scmp.eq.s32.totalorder %s26, 0
      %p82 = por %p80, %p81
      %p83 = scmp.ne.s32.totalorder %s71, %s72
      %p84 = scmp.eq.s32.totalorder %s27, 1
      %p85 = por %p83, %p84
      %p87 = scmp.ne.s32.totalorder %s72, %s86
      %p88 = scmp.eq.s32.totalorder %s27, 0
      %p89 = por %p87, %p88
      %s90 = sadd.s32 %s28, %s29
      %s91 = sadd.s32 %s40, %s36
      %s92 = ssub.s32 %s90, %s91
      %p93 = scmp.eq.s32.totalorder %s92, 0
      %s95 = sadd.s32 %s94, 1
      %s96 = scalar_select %p93, %s94, %s95
      %p99 = pneg %p93
      %p100 = scmp.eq.s32.totalorder %s21, 1
      %p101 = por %p99, %p100
      %p102 = scmp.ne.s32.totalorder %s94, %s97
      %p103 = scmp.eq.s32.totalorder %s21, 0
      %p104 = por %p102, %p103
      %p105 = scmp.ne.s32.totalorder %s94, %s97
      %p106 = scmp.eq.s32.totalorder %s26, 1
      %p107 = por %p105, %p106
      %p108 = scmp.ne.s32.totalorder %s97, %s98
      %p109 = scmp.eq.s32.totalorder %s26, 0
      %p110 = por %p108, %p109
      %p111 = scmp.ne.s32.totalorder %s97, %s98
      %p112 = scmp.eq.s32.totalorder %s27, 1
      %p113 = por %p111, %p112
      %p115 = scmp.ne.s32.totalorder %s98, %s114
      %p116 = scmp.eq.s32.totalorder %s27, 0
      %p117 = por %p115, %p116
      %s118 = ssub.s32 %s28, %s40
      %p119 = scmp.eq.s32.totalorder %s118, 0
      %s121 = sadd.s32 %s120, 1
      %s122 = scalar_select %p119, %s120, %s121
      %p125 = pneg %p119
      %p126 = scmp.eq.s32.totalorder %s21, 1
      %p127 = por %p125, %p126
      %p128 = scmp.ne.s32.totalorder %s120, %s123
      %p129 = scmp.eq.s32.totalorder %s21, 0
      %p130 = por %p128, %p129
      %p131 = scmp.ne.s32.totalorder %s120, %s123
      %p132 = scmp.eq.s32.totalorder %s26, 1
      %p133 = por %p131, %p132
      %p134 = scmp.ne.s32.totalorder %s123, %s124
      %p135 = scmp.eq.s32.totalorder %s26, 0
      %p136 = por %p134, %p135
      %p137 = scmp.ne.s32.totalorder %s123, %s124
      %p138 = scmp.eq.s32.totalorder %s27, 1
      %p139 = por %p137, %p138
      %p141 = scmp.ne.s32.totalorder %s124, %s140
      %p142 = scmp.eq.s32.totalorder %s27, 0
      %p143 = por %p141, %p142
      %s144 = ssub.s32 %s28, %s40
      %p145 = scmp.eq.s32.totalorder %s144, 0
      %s147 = sadd.s32 %s146, 1
      %s148 = scalar_select %p145, %s146, %s147
      %p151 = pneg %p145
      %p152 = scmp.eq.s32.totalorder %s21, 1
      %p153 = por %p151, %p152
      %p154 = scmp.ne.s32.totalorder %s146, %s149
      %p155 = scmp.eq.s32.totalorder %s21, 0
      %p156 = por %p154, %p155
      %p157 = scmp.ne.s32.totalorder %s146, %s149
      %p158 = scmp.eq.s32.totalorder %s26, 1
      %p159 = por %p157, %p158
      %p160 = scmp.ne.s32.totalorder %s149, %s150
      %p161 = scmp.eq.s32.totalorder %s26, 0
      %p162 = por %p160, %p161
      %p163 = scmp.ne.s32.totalorder %s149, %s150
      %p164 = scmp.eq.s32.totalorder %s27, 1
      %p165 = por %p163, %p164
      %p167 = scmp.ne.s32.totalorder %s150, %s166
      %p168 = scmp.eq.s32.totalorder %s27, 0
      %p169 = por %p167, %p168
      %p170 = scmp.le.s32.totalorder 1, %s21
      %p171 = scmp.lt.s32.totalorder %s21, 3
      %p172 = pnand %p170, %p171
      %p173 = pneg %p172
      // Predicated region
      $region9: #{tpu_custom_call.1} parent=5 // pred_check
        _
      $region10: #{tpu_custom_call.1} parent=5 // pred_check_branch
        %175 = sbr.rel (%p172) target = $region12
      $region11: #{tpu_custom_call.1} parent=5 // pred_region
        %s176 = ssub.s32 %s21, 1
        // Predicated region
        $region13: #{tpu_custom_call.1} parent=11 // pred_check
          %p177 = pneg %p82
        $region14: #{tpu_custom_call.1} parent=11 // pred_check_branch
          %179 = sbr.rel (%p177) target = $region16
        $region15: #{tpu_custom_call.1} parent=11 // pred_region
          %s181 = ssub.s32 1024, 1024
          %182 = vsyncadd [#allocation6], %s181
          %s183 = sshll.u32 [#allocation5], 4
          %s184 = int_to_ptr.vmem [resolvable:$true] %s183
          %189 = dma.hbm_to_vmem [thread:$0]  %s1, 1024, %s184, [#allocation6], 64, 64, 4
        $region16: #{tpu_custom_call.1} parent=11 // pred_fallthru
          _
      $region12: #{tpu_custom_call.1} parent=5 // pred_fallthru
        _
      %p190 = scmp.lt.s32.totalorder %s21, 2
      // Predicated region
      $region17: #{tpu_custom_call.1} parent=5 // pred_check
        %p191 = pneg %p190
      $region18: #{tpu_custom_call.1} parent=5 // pred_check_branch
        %193 = sbr.rel (%p191) target = $region20
      $region19: #{tpu_custom_call.1} parent=5 // pred_region
        // Predicated region
        $region21: #{tpu_custom_call.1} parent=19 // pred_check
          %p194 = pneg %p55
        $region22: #{tpu_custom_call.1} parent=19 // pred_check_branch
          %196 = sbr.rel (%p194) target = $region24
        $region23: #{tpu_custom_call.1} parent=19 // pred_region
          %s197 = sand.u32 %s45, 1
          %s198 = scalar_lea.sflag [#allocation3], %s197
          %s199 = sand.u32 %s45, 1
          %s200 = smul.addr %s199, 128
          %s201 = scalar_lea.vmem [#allocation2], %s200
          %s202 = sadd.s32 %s28, %s29
          %s203 = smul.u32 32, %s202
          %s205 = ssub.s32 2048, 2048
          %206 = vsyncadd %s198, %s205
          %s207 = smul.addr %s203, 64
          %s208 = scalar_lea.hbm %s0, %s207
          %s209 = sshll.u32 %s201, 4
          %s210 = int_to_ptr.vmem [resolvable:$true] %s209
          %215 = dma.hbm_to_vmem [thread:$0]  %s208, 2048, %s210, %s198, 64, 64, 4
        $region24: #{tpu_custom_call.1} parent=19 // pred_fallthru
          _
      $region20: #{tpu_custom_call.1} parent=5 // pred_fallthru
        _
      %p216 = scmp.le.s32.totalorder 1, %s21
      %p217 = scmp.lt.s32.totalorder %s21, 3
      %p218 = pnand %p216, %p217
      %p219 = pneg %p218
      // Predicated region
      $region25: #{tpu_custom_call.1} parent=5 // pred_check
        _
      $region26: #{tpu_custom_call.1} parent=5 // pred_check_branch
        %221 = sbr.rel (%p218) target = $region28
      $region27: #{tpu_custom_call.1} parent=5 // pred_region
        %s222 = ssub.s32 %s21, 1
        %s223 = sand.u32 %s48, 1
        %s224 = scalar_lea.sflag [#allocation3], %s223
        %s225 = sand.u32 %s48, 1
        %s226 = smul.addr %s225, 128
        %s227 = scalar_lea.vmem [#allocation2], %s226
        // Predicated region
        $region29: #{tpu_custom_call.1} parent=27 // pred_check
          %p228 = pneg %p61
        $region30: #{tpu_custom_call.1} parent=27 // pred_check_branch
          %230 = sbr.rel (%p228) target = $region32
        $region31: #{tpu_custom_call.1} parent=27 // pred_region
          %231 = dma.done %s224, 2048
        $region32: #{tpu_custom_call.1} parent=27 // pred_fallthru
          _
        // Predicated region
        $region33: #{tpu_custom_call.1} parent=27 // pred_check
          %p232 = pneg %p82
        $region34: #{tpu_custom_call.1} parent=27 // pred_check_branch
          %234 = sbr.rel (%p232) target = $region36
        $region35: #{tpu_custom_call.1} parent=27 // pred_region
          %235 = dma.done [#allocation6], 1024
        $region36: #{tpu_custom_call.1} parent=27 // pred_fallthru
          _
        %s236 = sand.u32 %s48, 1
        %s237 = scalar_lea.sflag [#allocation3], %s236
        %s238 = sand.u32 %s48, 1
        %s239 = smul.addr %s238, 128
        %s240 = scalar_lea.vmem [#allocation2], %s239
        %p241 = pneg %p61
        %p242 = pneg %p58
        %p243 = pneg %p82
        %p244 = pneg %p79
        %p245 = pneg %p110
        %p246 = pneg %p107
        %s247 = sand.u32 %s97, 1
        %s248 = scalar_lea.sflag [#allocation4], %s247
        %s249 = sand.u32 %s97, 1
        %s250 = smul.addr %s249, 128
        %s251 = scalar_lea.vmem [#allocation7], %s250
        %p252 = pneg %p136
        %p253 = pneg %p133
        %s254 = sand.u32 %s26, 1
        %s255 = scalar_lea.sflag [#allocation9], %s254
        %s256 = sand.u32 %s123, 1
        %s257 = smul.addr %s256, 8
        %s258 = scalar_lea.vmem [#allocation8], %s257
        %p259 = pneg %p162
        %p260 = pneg %p159
        %s261 = sand.u32 %s26, 1
        %s262 = scalar_lea.sflag [#allocation9], %s261
        %s263 = sand.u32 %s149, 1
        %s264 = smul.addr %s263, 8
        %s265 = scalar_lea.vmem [#allocation10], %s264
        %s266 = sadd.s32 %s30, %s31
        %s267 = smul.u32 32, %s266
        %s268 = sadd.s32 %s30, %s31
        %s269 = smul.u32 32, %s268
        %p271 = scmp.eq.s32.totalorder %s31, 0
        // Predicated region
        $region37: #{tpu_custom_call.1} parent=27 // pred_check
          %p272 = pneg %p271
        $region38: #{tpu_custom_call.1} parent=27 // pred_check_branch
          %274 = sbr.rel (%p272) target = $region40
        $region39: #{tpu_custom_call.1} parent=27 // pred_region
          %275 = vst [vmem:[%s258] sm:$0xff] 0.0
          %276 = vst [vmem:[%s265] sm:$0xff] 0.0
        $region40: #{tpu_custom_call.1} parent=27 // pred_fallthru
          _
        %v277 = vld [vmem:[%s227] sm:$0xf]
        %v278 = vld [vmem:[%s227 + $0x4] sm:$0xf]
        %v279 = vld [vmem:[%s227 + $0x8] sm:$0xf]
        %v280 = vld [vmem:[%s227 + $0xc] sm:$0xf]
        %v281 = vld [vmem:[%s227 + $0x10] sm:$0xf]
        %v282 = vld [vmem:[%s227 + $0x14] sm:$0xf]
        %v283 = vld [vmem:[%s227 + $0x18] sm:$0xf]
        %v284 = vld [vmem:[%s227 + $0x1c] sm:$0xf]
        %v285 = vld [vmem:[%s227 + $0x20] sm:$0xf]
        %v286 = vld [vmem:[%s227 + $0x24] sm:$0xf]
        %v287 = vld [vmem:[%s227 + $0x28] sm:$0xf]
        %v288 = vld [vmem:[%s227 + $0x2c] sm:$0xf]
        %v289 = vld [vmem:[%s227 + $0x30] sm:$0xf]
        %v290 = vld [vmem:[%s227 + $0x34] sm:$0xf]
        %v291 = vld [vmem:[%s227 + $0x38] sm:$0xf]
        %v292 = vld [vmem:[%s227 + $0x3c] sm:$0xf]
        %v293 = vld [vmem:[%s227 + $0x40] sm:$0xf]
        %v294 = vld [vmem:[%s227 + $0x44] sm:$0xf]
        %v295 = vld [vmem:[%s227 + $0x48] sm:$0xf]
        %v296 = vld [vmem:[%s227 + $0x4c] sm:$0xf]
        %v297 = vld [vmem:[%s227 + $0x50] sm:$0xf]
        %v298 = vld [vmem:[%s227 + $0x54] sm:$0xf]
        %v299 = vld [vmem:[%s227 + $0x58] sm:$0xf]
        %v300 = vld [vmem:[%s227 + $0x5c] sm:$0xf]
        %v301 = vld [vmem:[%s227 + $0x60] sm:$0xf]
        %v302 = vld [vmem:[%s227 + $0x64] sm:$0xf]
        %v303 = vld [vmem:[%s227 + $0x68] sm:$0xf]
        %v304 = vld [vmem:[%s227 + $0x6c] sm:$0xf]
        %v305 = vld [vmem:[%s227 + $0x70] sm:$0xf]
        %v306 = vld [vmem:[%s227 + $0x74] sm:$0xf]
        %v307 = vld [vmem:[%s227 + $0x78] sm:$0xf]
        %v308 = vld [vmem:[%s227 + $0x7c] sm:$0xf]
        %v309 = vld [vmem:[#allocation5] sm:$0xf]
        %v310 = vld [vmem:[#allocation5 + $0x4] sm:$0xf]
        %v311 = vld [vmem:[#allocation5 + $0x8] sm:$0xf]
        %v312 = vld [vmem:[#allocation5 + $0xc] sm:$0xf]
        %v313 = vld [vmem:[#allocation5 + $0x10] sm:$0xf]
        %v314 = vld [vmem:[#allocation5 + $0x14] sm:$0xf]
        %v315 = vld [vmem:[#allocation5 + $0x18] sm:$0xf]
        %v316 = vld [vmem:[#allocation5 + $0x1c] sm:$0xf]
        %v317 = vld [vmem:[#allocation5 + $0x20] sm:$0xf]
        %v318 = vld [vmem:[#allocation5 + $0x24] sm:$0xf]
        %v319 = vld [vmem:[#allocation5 + $0x28] sm:$0xf]
        %v320 = vld [vmem:[#allocation5 + $0x2c] sm:$0xf]
        %v321 = vld [vmem:[#allocation5 + $0x30] sm:$0xf]
        %v322 = vld [vmem:[#allocation5 + $0x34] sm:$0xf]
        %v323 = vld [vmem:[#allocation5 + $0x38] sm:$0xf]
        %v324 = vld [vmem:[#allocation5 + $0x3c] sm:$0xf]
        %v357 = vunpack.c.l.b16 %v277
        %v358 = vunpack.c.l.b16 %v278
        %v359 = vunpack.c.l.b16 %v279
        %v360 = vunpack.c.l.b16 %v280
        %v361 = vunpack.c.l.b16 %v281
        %v362 = vunpack.c.l.b16 %v282
        %v363 = vunpack.c.l.b16 %v283
        %v364 = vunpack.c.l.b16 %v284
        %v365 = vunpack.c.l.b16 %v285
        %v366 = vunpack.c.l.b16 %v286
        %v367 = vunpack.c.l.b16 %v287
        %v368 = vunpack.c.l.b16 %v288
        %v369 = vunpack.c.l.b16 %v289
        %v370 = vunpack.c.l.b16 %v290
        %v371 = vunpack.c.l.b16 %v291
        %v372 = vunpack.c.l.b16 %v292
        %v373 = vunpack.c.l.b16 %v293
        %v374 = vunpack.c.l.b16 %v294
        %v375 = vunpack.c.l.b16 %v295
        %v376 = vunpack.c.l.b16 %v296
        %v377 = vunpack.c.l.b16 %v297
        %v378 = vunpack.c.l.b16 %v298
        %v379 = vunpack.c.l.b16 %v299
        %v380 = vunpack.c.l.b16 %v300
        %v381 = vunpack.c.l.b16 %v301
        %v382 = vunpack.c.l.b16 %v302
        %v383 = vunpack.c.l.b16 %v303
        %v384 = vunpack.c.l.b16 %v304
        %v385 = vunpack.c.l.b16 %v305
        %v386 = vunpack.c.l.b16 %v306
        %v387 = vunpack.c.l.b16 %v307
        %v388 = vunpack.c.l.b16 %v308
        %v389 = vpack.c.b16 %v358, %v357
        %v390 = vpack.c.b16 %v360, %v359
        %v391 = vpack.c.b16 %v362, %v361
        %v392 = vpack.c.b16 %v364, %v363
        %v393 = vpack.c.b16 %v366, %v365
        %v394 = vpack.c.b16 %v368, %v367
        %v395 = vpack.c.b16 %v370, %v369
        %v396 = vpack.c.b16 %v372, %v371
        %v397 = vpack.c.b16 %v374, %v373
        %v398 = vpack.c.b16 %v376, %v375
        %v399 = vpack.c.b16 %v378, %v377
        %v400 = vpack.c.b16 %v380, %v379
        %v401 = vpack.c.b16 %v382, %v381
        %v402 = vpack.c.b16 %v384, %v383
        %v403 = vpack.c.b16 %v386, %v385
        %v404 = vpack.c.b16 %v388, %v387
        %v437 = vunpack.c.l.b16 %v309
        %v438 = vunpack.c.l.b16 %v310
        %v439 = vunpack.c.l.b16 %v311
        %v440 = vunpack.c.l.b16 %v312
        %v441 = vunpack.c.l.b16 %v313
        %v442 = vunpack.c.l.b16 %v314
        %v443 = vunpack.c.l.b16 %v315
        %v444 = vunpack.c.l.b16 %v316
        %v445 = vunpack.c.l.b16 %v317
        %v446 = vunpack.c.l.b16 %v318
        %v447 = vunpack.c.l.b16 %v319
        %v448 = vunpack.c.l.b16 %v320
        %v449 = vunpack.c.l.b16 %v321
        %v450 = vunpack.c.l.b16 %v322
        %v451 = vunpack.c.l.b16 %v323
        %v452 = vunpack.c.l.b16 %v324
        %v453 = vpack.c.b16 %v438, %v437
        %v454 = vpack.c.b16 %v440, %v439
        %v455 = vpack.c.b16 %v442, %v441
        %v456 = vpack.c.b16 %v444, %v443
        %v457 = vpack.c.b16 %v446, %v445
        %v458 = vpack.c.b16 %v448, %v447
        %v459 = vpack.c.b16 %v450, %v449
        %v460 = vpack.c.b16 %v452, %v451
        %469 = vmatprep.subr.bf16.mxu0 0
        %470 = vmatpush1.bf16.msra.mxu0 %v453
        %471 = vmatprep.subr.bf16.mxu0 0
        %472 = vmatpush1.bf16.msra.mxu0 %v454
        %473 = vmatprep.subr.bf16.mxu0 0
        %474 = vmatpush1.bf16.msra.mxu0 %v455
        %475 = vmatprep.subr.bf16.mxu0 0
        %476 = vmatpush1.bf16.msra.mxu0 %v456
        %477 = vmatprep.subr.bf16.mxu0 0
        %478 = vmatpush1.bf16.msra.mxu0 %v457
        %479 = vmatprep.subr.bf16.mxu0 0
        %480 = vmatpush1.bf16.msra.mxu0 %v458
        %481 = vmatprep.subr.bf16.mxu0 0
        %482 = vmatpush1.bf16.msra.mxu0 %v459
        %483 = vmatprep.subr.bf16.mxu0 0
        %484 = vmatpush1.bf16.msra.mxu0 %v460
        %485 = vmatprep.subr.bf16.mxu0 0
        %486 = vmatpush1.bf16.msra.mxu0 0
        %487 = vmatprep.subr.bf16.mxu0 0
        %488 = vmatpush1.bf16.msra.mxu0 0
        %489 = vmatprep.subr.bf16.mxu0 0
        %490 = vmatpush1.bf16.msra.mxu0 0
        %491 = vmatprep.subr.bf16.mxu0 0
        %492 = vmatpush1.bf16.msra.mxu0 0
        %493 = vmatprep.subr.bf16.mxu0 0
        %494 = vmatpush1.bf16.msra.mxu0 0
        %495 = vmatprep.subr.bf16.mxu0 0
        %496 = vmatpush1.bf16.msra.mxu0 0
        %497 = vmatprep.subr.bf16.mxu0 0
        %498 = vmatpush1.bf16.msra.mxu0 0
        %499 = vmatprep.subr.bf16.mxu0 0
        %500 = vmatpush1.bf16.msra.mxu0 0
        %501 = vmatprep.mubr.bf16.mxu0 0
        %502 = vmatmul.mubr.bf16.gmra.mrb[0].mxu0 %v389
        %v503 = vpop.f32.mrb[0].mxu0
        %v504 = vadd.f32 0.0, %v503
        %v505 = vpop.f32.mrb[0].mxu0
        %v506 = vpop.f32.mrb[0].mxu0
        %v507 = vadd.f32 0.0, %v506
        %v508 = vpop.f32.mrb[0].mxu0
        %509 = vmatprep.mubr.bf16.mxu0 0
        %510 = vmatmul.mubr.bf16.gmra.mrb[0].mxu0 %v390
        %v511 = vpop.f32.mrb[0].mxu0
        %v512 = vadd.f32 0.0, %v511
        %v513 = vpop.f32.mrb[0].mxu0
        %v514 = vpop.f32.mrb[0].mxu0
        %v515 = vadd.f32 0.0, %v514
        %v516 = vpop.f32.mrb[0].mxu0
        %517 = vmatprep.mubr.bf16.mxu0 0
        %518 = vmatmul.mubr.bf16.gmra.mrb[0].mxu0 %v391
        %v519 = vpop.f32.mrb[0].mxu0
        %v520 = vadd.f32 0.0, %v519
        %v521 = vpop.f32.mrb[0].mxu0
        %v522 = vpop.f32.mrb[0].mxu0
        %v523 = vadd.f32 0.0, %v522
        %v524 = vpop.f32.mrb[0].mxu0
        %525 = vmatprep.mubr.bf16.mxu0 0
        %526 = vmatmul.mubr.bf16.gmra.mrb[0].mxu0 %v392
        %v527 = vpop.f32.mrb[0].mxu0
        %v528 = vadd.f32 0.0, %v527
        %v529 = vpop.f32.mrb[0].mxu0
        %v530 = vpop.f32.mrb[0].mxu0
        %v531 = vadd.f32 0.0, %v530
        %v532 = vpop.f32.mrb[0].mxu0
        %533 = vmatprep.mubr.bf16.mxu0 0
        %534 = vmatmul.mubr.bf16.gmra.mrb[0].mxu0 %v393
        %v535 = vpop.f32.mrb[0].mxu0
        %v536 = vadd.f32 0.0, %v535
        %v537 = vpop.f32.mrb[0].mxu0
        %v538 = vpop.f32.mrb[0].mxu0
        %v539 = vadd.f32 0.0, %v538
        %v540 = vpop.f32.mrb[0].mxu0
        %541 = vmatprep.mubr.bf16.mxu0 0
        %542 = vmatmul.mubr.bf16.gmra.mrb[0].mxu0 %v394
        %v543 = vpop.f32.mrb[0].mxu0
        %v544 = vadd.f32 0.0, %v543
        %v545 = vpop.f32.mrb[0].mxu0
        %v546 = vpop.f32.mrb[0].mxu0
        %v547 = vadd.f32 0.0, %v546
        %v548 = vpop.f32.mrb[0].mxu0
        %549 = vmatprep.mubr.bf16.mxu0 0
        %550 = vmatmul.mubr.bf16.gmra.mrb[0].mxu0 %v395
        %v551 = vpop.f32.mrb[0].mxu0
        %v552 = vadd.f32 0.0, %v551
        %v553 = vpop.f32.mrb[0].mxu0
        %v554 = vpop.f32.mrb[0].mxu0
        %v555 = vadd.f32 0.0, %v554
        %v556 = vpop.f32.mrb[0].mxu0
        %557 = vmatprep.mubr.bf16.mxu0 0
        %558 = vmatmul.mubr.bf16.gmra.mrb[0].mxu0 %v396
        %v559 = vpop.f32.mrb[0].mxu0
        %v560 = vadd.f32 0.0, %v559
        %v561 = vpop.f32.mrb[0].mxu0
        %v562 = vpop.f32.mrb[0].mxu0
        %v563 = vadd.f32 0.0, %v562
        %v564 = vpop.f32.mrb[0].mxu0
        %565 = vmatprep.mubr.bf16.mxu0 0
        %566 = vmatmul.mubr.bf16.gmra.mrb[0].mxu0 %v397
        %v567 = vpop.f32.mrb[0].mxu0
        %v568 = vadd.f32 0.0, %v567
        %v569 = vpop.f32.mrb[0].mxu0
        %v570 = vpop.f32.mrb[0].mxu0
        %v571 = vadd.f32 0.0, %v570
        %v572 = vpop.f32.mrb[0].mxu0
        %573 = vmatprep.mubr.bf16.mxu0 0
        %574 = vmatmul.mubr.bf16.gmra.mrb[0].mxu0 %v398
        %v575 = vpop.f32.mrb[0].mxu0
        %v576 = vadd.f32 0.0, %v575
        %v577 = vpop.f32.mrb[0].mxu0
        %v578 = vpop.f32.mrb[0].mxu0
        %v579 = vadd.f32 0.0, %v578
        %v580 = vpop.f32.mrb[0].mxu0
        %581 = vmatprep.mubr.bf16.mxu0 0
        %582 = vmatmul.mubr.bf16.gmra.mrb[0].mxu0 %v399
        %v583 = vpop.f32.mrb[0].mxu0
        %v584 = vadd.f32 0.0, %v583
        %v585 = vpop.f32.mrb[0].mxu0
        %v586 = vpop.f32.mrb[0].mxu0
        %v587 = vadd.f32 0.0, %v586
        %v588 = vpop.f32.mrb[0].mxu0
        %589 = vmatprep.mubr.bf16.mxu0 0
        %590 = vmatmul.mubr.bf16.gmra.mrb[0].mxu0 %v400
        %v591 = vpop.f32.mrb[0].mxu0
        %v592 = vadd.f32 0.0, %v591
        %v593 = vpop.f32.mrb[0].mxu0
        %v594 = vpop.f32.mrb[0].mxu0
        %v595 = vadd.f32 0.0, %v594
        %v596 = vpop.f32.mrb[0].mxu0
        %597 = vmatprep.mubr.bf16.mxu0 0
        %598 = vmatmul.mubr.bf16.gmra.mrb[0].mxu0 %v401
        %v599 = vpop.f32.mrb[0].mxu0
        %v600 = vadd.f32 0.0, %v599
        %v601 = vpop.f32.mrb[0].mxu0
        %v602 = vpop.f32.mrb[0].mxu0
        %v603 = vadd.f32 0.0, %v602
        %v604 = vpop.f32.mrb[0].mxu0
        %605 = vmatprep.mubr.bf16.mxu0 0
        %606 = vmatmul.mubr.bf16.gmra.mrb[0].mxu0 %v402
        %v607 = vpop.f32.mrb[0].mxu0
        %v608 = vadd.f32 0.0, %v607
        %v609 = vpop.f32.mrb[0].mxu0
        %v610 = vpop.f32.mrb[0].mxu0
        %v611 = vadd.f32 0.0, %v610
        %v612 = vpop.f32.mrb[0].mxu0
        %613 = vmatprep.mubr.bf16.mxu0 0
        %614 = vmatmul.mubr.bf16.gmra.mrb[0].mxu0 %v403
        %v615 = vpop.f32.mrb[0].mxu0
        %v616 = vadd.f32 0.0, %v615
        %v617 = vpop.f32.mrb[0].mxu0
        %v618 = vpop.f32.mrb[0].mxu0
        %v619 = vadd.f32 0.0, %v618
        %v620 = vpop.f32.mrb[0].mxu0
        %621 = vmatprep.mubr.bf16.mxu0 0
        %622 = vmatmul.mubr.bf16.gmra.mrb[0].mxu0 %v404
        %v623 = vpop.f32.mrb[0].mxu0
        %v624 = vadd.f32 0.0, %v623
        %v625 = vpop.f32.mrb[0].mxu0
        %v626 = vpop.f32.mrb[0].mxu0
        %v627 = vadd.f32 0.0, %v626
        %v628 = vpop.f32.mrb[0].mxu0
        %629 = vdwg.mxu0
        %v630 = vpack.c.bf16 %v507, %v504
        %v631 = vpack.c.bf16 %v515, %v512
        %v632 = vpack.c.bf16 %v523, %v520
        %v633 = vpack.c.bf16 %v531, %v528
        %v634 = vpack.c.bf16 %v539, %v536
        %v635 = vpack.c.bf16 %v547, %v544
        %v636 = vpack.c.bf16 %v555, %v552
        %v637 = vpack.c.bf16 %v563, %v560
        %v638 = vpack.c.bf16 %v571, %v568
        %v639 = vpack.c.bf16 %v579, %v576
        %v640 = vpack.c.bf16 %v587, %v584
        %v641 = vpack.c.bf16 %v595, %v592
        %v642 = vpack.c.bf16 %v603, %v600
        %v643 = vpack.c.bf16 %v611, %v608
        %v644 = vpack.c.bf16 %v619, %v616
        %v645 = vpack.c.bf16 %v627, %v624
        %v662 = vunpack.c.l.b16 %v630
        %v663 = vunpack.c.h.b16 %v630
        %v664 = vunpack.c.l.b16 %v631
        %v665 = vunpack.c.h.b16 %v631
        %v666 = vunpack.c.l.b16 %v632
        %v667 = vunpack.c.h.b16 %v632
        %v668 = vunpack.c.l.b16 %v633
        %v669 = vunpack.c.h.b16 %v633
        %v670 = vunpack.c.l.b16 %v634
        %v671 = vunpack.c.h.b16 %v634
        %v672 = vunpack.c.l.b16 %v635
        %v673 = vunpack.c.h.b16 %v635
        %v674 = vunpack.c.l.b16 %v636
        %v675 = vunpack.c.h.b16 %v636
        %v676 = vunpack.c.l.b16 %v637
        %v677 = vunpack.c.h.b16 %v637
        %v678 = vunpack.c.l.b16 %v638
        %v679 = vunpack.c.h.b16 %v638
        %v680 = vunpack.c.l.b16 %v639
        %v681 = vunpack.c.h.b16 %v639
        %v682 = vunpack.c.l.b16 %v640
        %v683 = vunpack.c.h.b16 %v640
        %v684 = vunpack.c.l.b16 %v641
        %v685 = vunpack.c.h.b16 %v641
        %v686 = vunpack.c.l.b16 %v642
        %v687 = vunpack.c.h.b16 %v642
        %v688 = vunpack.c.l.b16 %v643
        %v689 = vunpack.c.h.b16 %v643
        %v690 = vunpack.c.l.b16 %v644
        %v691 = vunpack.c.h.b16 %v644
        %v692 = vunpack.c.l.b16 %v645
        %v693 = vunpack.c.h.b16 %v645
        %v694 = vpack.c.b16 %v662, %v662
        %v695 = vpack.c.b16 %v663, %v663
        %v696 = vpack.c.b16 %v664, %v664
        %v697 = vpack.c.b16 %v665, %v665
        %v698 = vpack.c.b16 %v666, %v666
        %v699 = vpack.c.b16 %v667, %v667
        %v700 = vpack.c.b16 %v668, %v668
        %v701 = vpack.c.b16 %v669, %v669
        %v702 = vpack.c.b16 %v670, %v670
        %v703 = vpack.c.b16 %v671, %v671
        %v704 = vpack.c.b16 %v672, %v672
        %v705 = vpack.c.b16 %v673, %v673
        %v706 = vpack.c.b16 %v674, %v674
        %v707 = vpack.c.b16 %v675, %v675
        %v708 = vpack.c.b16 %v676, %v676
        %v709 = vpack.c.b16 %v677, %v677
        %v710 = vpack.c.b16 %v678, %v678
        %v711 = vpack.c.b16 %v679, %v679
        %v712 = vpack.c.b16 %v680, %v680
        %v713 = vpack.c.b16 %v681, %v681
        %v714 = vpack.c.b16 %v682, %v682
        %v715 = vpack.c.b16 %v683, %v683
        %v716 = vpack.c.b16 %v684, %v684
        %v717 = vpack.c.b16 %v685, %v685
        %v718 = vpack.c.b16 %v686, %v686
        %v719 = vpack.c.b16 %v687, %v687
        %v720 = vpack.c.b16 %v688, %v688
        %v721 = vpack.c.b16 %v689, %v689
        %v722 = vpack.c.b16 %v690, %v690
        %v723 = vpack.c.b16 %v691, %v691
        %v724 = vpack.c.b16 %v692, %v692
        %v725 = vpack.c.b16 %v693, %v693
        %758 = vst [vmem:[%s251] sm:$0xf] %v694
        %759 = vst [vmem:[%s251 + $0x4] sm:$0xf] %v695
        %760 = vst [vmem:[%s251 + $0x8] sm:$0xf] %v696
        %761 = vst [vmem:[%s251 + $0xc] sm:$0xf] %v697
        %762 = vst [vmem:[%s251 + $0x10] sm:$0xf] %v698
        %763 = vst [vmem:[%s251 + $0x14] sm:$0xf] %v699
        %764 = vst [vmem:[%s251 + $0x18] sm:$0xf] %v700
        %765 = vst [vmem:[%s251 + $0x1c] sm:$0xf] %v701
        %766 = vst [vmem:[%s251 + $0x20] sm:$0xf] %v702
        %767 = vst [vmem:[%s251 + $0x24] sm:$0xf] %v703
        %768 = vst [vmem:[%s251 + $0x28] sm:$0xf] %v704
        %769 = vst [vmem:[%s251 + $0x2c] sm:$0xf] %v705
        %770 = vst [vmem:[%s251 + $0x30] sm:$0xf] %v706
        %771 = vst [vmem:[%s251 + $0x34] sm:$0xf] %v707
        %772 = vst [vmem:[%s251 + $0x38] sm:$0xf] %v708
        %773 = vst [vmem:[%s251 + $0x3c] sm:$0xf] %v709
        %774 = vst [vmem:[%s251 + $0x40] sm:$0xf] %v710
        %775 = vst [vmem:[%s251 + $0x44] sm:$0xf] %v711
        %776 = vst [vmem:[%s251 + $0x48] sm:$0xf] %v712
        %777 = vst [vmem:[%s251 + $0x4c] sm:$0xf] %v713
        %778 = vst [vmem:[%s251 + $0x50] sm:$0xf] %v714
        %779 = vst [vmem:[%s251 + $0x54] sm:$0xf] %v715
        %780 = vst [vmem:[%s251 + $0x58] sm:$0xf] %v716
        %781 = vst [vmem:[%s251 + $0x5c] sm:$0xf] %v717
        %782 = vst [vmem:[%s251 + $0x60] sm:$0xf] %v718
        %783 = vst [vmem:[%s251 + $0x64] sm:$0xf] %v719
        %784 = vst [vmem:[%s251 + $0x68] sm:$0xf] %v720
        %785 = vst [vmem:[%s251 + $0x6c] sm:$0xf] %v721
        %786 = vst [vmem:[%s251 + $0x70] sm:$0xf] %v722
        %787 = vst [vmem:[%s251 + $0x74] sm:$0xf] %v723
        %788 = vst [vmem:[%s251 + $0x78] sm:$0xf] %v724
        %789 = vst [vmem:[%s251 + $0x7c] sm:$0xf] %v725
        %v790 = vunpack.c.l.bf16 %v630
        %v791 = vunpack.c.h.bf16 %v630
        %v792 = vunpack.c.l.bf16 %v631
        %v793 = vunpack.c.h.bf16 %v631
        %v794 = vunpack.c.l.bf16 %v632
        %v795 = vunpack.c.h.bf16 %v632
        %v796 = vunpack.c.l.bf16 %v633
        %v797 = vunpack.c.h.bf16 %v633
        %v798 = vunpack.c.l.bf16 %v634
        %v799 = vunpack.c.h.bf16 %v634
        %v800 = vunpack.c.l.bf16 %v635
        %v801 = vunpack.c.h.bf16 %v635
        %v802 = vunpack.c.l.bf16 %v636
        %v803 = vunpack.c.h.bf16 %v636
        %v804 = vunpack.c.l.bf16 %v637
        %v805 = vunpack.c.h.bf16 %v637
        %v806 = vunpack.c.l.bf16 %v638
        %v807 = vunpack.c.h.bf16 %v638
        %v808 = vunpack.c.l.bf16 %v639
        %v809 = vunpack.c.h.bf16 %v639
        %v810 = vunpack.c.l.bf16 %v640
        %v811 = vunpack.c.h.bf16 %v640
        %v812 = vunpack.c.l.bf16 %v641
        %v813 = vunpack.c.h.bf16 %v641
        %v814 = vunpack.c.l.bf16 %v642
        %v815 = vunpack.c.h.bf16 %v642
        %v816 = vunpack.c.l.bf16 %v643
        %v817 = vunpack.c.h.bf16 %v643
        %v818 = vunpack.c.l.bf16 %v644
        %v819 = vunpack.c.h.bf16 %v644
        %v820 = vunpack.c.l.bf16 %v645
        %v821 = vunpack.c.h.bf16 %v645
        %v822 = vld [vmem:[%s258] sm:$0xff]
        %v823 = vadd.f32 %v790, %v791
        %v824 = vadd.f32 %v823, %v792
        %v825 = vadd.f32 %v824, %v793
        %v826 = vadd.f32 %v825, %v794
        %v827 = vadd.f32 %v826, %v795
        %v828 = vadd.f32 %v827, %v796
        %v829 = vadd.f32 %v828, %v797
        %v830 = vadd.f32 %v829, %v798
        %v831 = vadd.f32 %v830, %v799
        %v832 = vadd.f32 %v831, %v800
        %v833 = vadd.f32 %v832, %v801
        %v834 = vadd.f32 %v833, %v802
        %v835 = vadd.f32 %v834, %v803
        %v836 = vadd.f32 %v835, %v804
        %v837 = vadd.f32 %v836, %v805
        %v838 = vadd.f32 %v837, %v806
        %v839 = vadd.f32 %v838, %v807
        %v840 = vadd.f32 %v839, %v808
        %v841 = vadd.f32 %v840, %v809
        %v842 = vadd.f32 %v841, %v810
        %v843 = vadd.f32 %v842, %v811
        %v844 = vadd.f32 %v843, %v812
        %v845 = vadd.f32 %v844, %v813
        %v846 = vadd.f32 %v845, %v814
        %v847 = vadd.f32 %v846, %v815
        %v848 = vadd.f32 %v847, %v816
        %v849 = vadd.f32 %v848, %v817
        %v850 = vadd.f32 %v849, %v818
        %v851 = vadd.f32 %v850, %v819
        %v852 = vadd.f32 %v851, %v820
        %v853 = vadd.f32 %v852, %v821
        %v854 = vadd.f32 %v822, %v853
        %855 = vst [vmem:[%s258] sm:$0xff] %v854
        %v856 = vld [vmem:[%s265] sm:$0xff]
        %v857 = vmul.f32 %v790, %v790
        %v858 = vmul.f32 %v791, %v791
        %v859 = vmul.f32 %v792, %v792
        %v860 = vmul.f32 %v793, %v793
        %v861 = vmul.f32 %v794, %v794
        %v862 = vmul.f32 %v795, %v795
        %v863 = vmul.f32 %v796, %v796
        %v864 = vmul.f32 %v797, %v797
        %v865 = vmul.f32 %v798, %v798
        %v866 = vmul.f32 %v799, %v799
        %v867 = vmul.f32 %v800, %v800
        %v868 = vmul.f32 %v801, %v801
        %v869 = vmul.f32 %v802, %v802
        %v870 = vmul.f32 %v803, %v803
        %v871 = vmul.f32 %v804, %v804
        %v872 = vmul.f32 %v805, %v805
        %v873 = vmul.f32 %v806, %v806
        %v874 = vmul.f32 %v807, %v807
        %v875 = vmul.f32 %v808, %v808
        %v876 = vmul.f32 %v809, %v809
        %v877 = vmul.f32 %v810, %v810
        %v878 = vmul.f32 %v811, %v811
        %v879 = vmul.f32 %v812, %v812
        %v880 = vmul.f32 %v813, %v813
        %v881 = vmul.f32 %v814, %v814
        %v882 = vmul.f32 %v815, %v815
        %v883 = vmul.f32 %v816, %v816
        %v884 = vmul.f32 %v817, %v817
        %v885 = vmul.f32 %v818, %v818
        %v886 = vmul.f32 %v819, %v819
        %v887 = vmul.f32 %v820, %v820
        %v888 = vmul.f32 %v821, %v821
        %v889 = vadd.f32 %v857, %v858
        %v890 = vadd.f32 %v889, %v859
        %v891 = vadd.f32 %v890, %v860
        %v892 = vadd.f32 %v891, %v861
        %v893 = vadd.f32 %v892, %v862
        %v894 = vadd.f32 %v893, %v863
        %v895 = vadd.f32 %v894, %v864
        %v896 = vadd.f32 %v895, %v865
        %v897 = vadd.f32 %v896, %v866
        %v898 = vadd.f32 %v897, %v867
        %v899 = vadd.f32 %v898, %v868
        %v900 = vadd.f32 %v899, %v869
        %v901 = vadd.f32 %v900, %v870
        %v902 = vadd.f32 %v901, %v871
        %v903 = vadd.f32 %v902, %v872
        %v904 = vadd.f32 %v903, %v873
        %v905 = vadd.f32 %v904, %v874
        %v906 = vadd.f32 %v905, %v875
        %v907 = vadd.f32 %v906, %v876
        %v908 = vadd.f32 %v907, %v877
        %v909 = vadd.f32 %v908, %v878
        %v910 = vadd.f32 %v909, %v879
        %v911 = vadd.f32 %v910, %v880
        %v912 = vadd.f32 %v911, %v881
        %v913 = vadd.f32 %v912, %v882
        %v914 = vadd.f32 %v913, %v883
        %v915 = vadd.f32 %v914, %v884
        %v916 = vadd.f32 %v915, %v885
        %v917 = vadd.f32 %v916, %v886
        %v918 = vadd.f32 %v917, %v887
        %v919 = vadd.f32 %v918, %v888
        %v920 = vadd.f32 %v856, %v919
        %921 = vst [vmem:[%s265] sm:$0xff] %v920
        %s922 = sand.u32 %s97, 1
        %s923 = scalar_lea.sflag [#allocation4], %s922
        %s924 = sand.u32 %s97, 1
        %s925 = smul.addr %s924, 128
        %s926 = scalar_lea.vmem [#allocation7], %s925
        %s927 = sand.u32 %s26, 1
        %s928 = scalar_lea.sflag [#allocation9], %s927
        %s929 = sand.u32 %s123, 1
        %s930 = smul.addr %s929, 8
        %s931 = scalar_lea.vmem [#allocation8], %s930
        %s932 = sand.u32 %s26, 1
        %s933 = scalar_lea.sflag [#allocation9], %s932
        %s934 = sand.u32 %s149, 1
        %s935 = smul.addr %s934, 8
        %s936 = scalar_lea.vmem [#allocation10], %s935
        // Predicated region
        $region41: #{tpu_custom_call.1} parent=27 // pred_check
          %p937 = pneg %p107
        $region42: #{tpu_custom_call.1} parent=27 // pred_check_branch
          %939 = sbr.rel (%p937) target = $region44
        $region43: #{tpu_custom_call.1} parent=27 // pred_region
          %s940 = sadd.s32 %s30, %s31
          %s941 = smul.u32 32, %s940
          %s943 = ssub.s32 2048, 2048
          %944 = vsyncadd %s923, %s943
          %s945 = smul.addr %s941, 64
          %s946 = scalar_lea.hbm %s2, %s945
          %s947 = sshll.u32 %s926, 4
          %s948 = int_to_ptr.vmem [resolvable:$true] %s947
          %953 = dma.vmem_to_hbm [thread:$0]  %s948, 2048, %s946, %s923, 64, 64, 4
        $region44: #{tpu_custom_call.1} parent=27 // pred_fallthru
          _
        // Predicated region
        $region45: #{tpu_custom_call.1} parent=27 // pred_check
          %p954 = pneg %p133
        $region46: #{tpu_custom_call.1} parent=27 // pred_check_branch
          %956 = sbr.rel (%p954) target = $region48
        $region47: #{tpu_custom_call.1} parent=27 // pred_region
          %s958 = ssub.s32 128, 128
          %959 = vsyncadd %s928, %s958
          %s960 = smul.addr %s30, 128
          %s961 = scalar_lea.hbm %s3, %s960
          %s963 = sshll.u32 %s931, 4
          %s964 = int_to_ptr.vmem [resolvable:$true] %s963
          %966 = dma.vmem_to_hbm [thread:$0]  %s964, 128, %s961, %s928
        $region48: #{tpu_custom_call.1} parent=27 // pred_fallthru
          _
        // Predicated region
        $region49: #{tpu_custom_call.1} parent=27 // pred_check
          %p967 = pneg %p159
        $region50: #{tpu_custom_call.1} parent=27 // pred_check_branch
          %969 = sbr.rel (%p967) target = $region52
        $region51: #{tpu_custom_call.1} parent=27 // pred_region
          %s971 = ssub.s32 128, 128
          %972 = vsyncadd %s933, %s971
          %s973 = smul.addr %s30, 128
          %s974 = scalar_lea.hbm %s4, %s973
          %s976 = sshll.u32 %s936, 4
          %s977 = int_to_ptr.vmem [resolvable:$true] %s976
          %979 = dma.vmem_to_hbm [thread:$0]  %s977, 128, %s974, %s933
        $region52: #{tpu_custom_call.1} parent=27 // pred_fallthru
          _
      $region28: #{tpu_custom_call.1} parent=5 // pred_fallthru
        _
      %p980 = scmp.le.s32.totalorder 2, %s21
      // Predicated region
      $region53: #{tpu_custom_call.1} parent=5 // pred_check
        %p981 = pneg %p980
      $region54: #{tpu_custom_call.1} parent=5 // pred_check_branch
        %983 = sbr.rel (%p981) target = $region56
      $region55: #{tpu_custom_call.1} parent=5 // pred_region
        %s984 = ssub.s32 %s21, 2
        // Predicated region
        $region57: #{tpu_custom_call.1} parent=55 // pred_check
          %p985 = pneg %p113
        $region58: #{tpu_custom_call.1} parent=55 // pred_check_branch
          %987 = sbr.rel (%p985) target = $region60
        $region59: #{tpu_custom_call.1} parent=55 // pred_region
          %s988 = sand.u32 %s98, 1
          %s989 = scalar_lea.sflag [#allocation4], %s988
          %s990 = sand.u32 %s98, 1
          %s991 = smul.addr %s990, 128
          %s992 = scalar_lea.vmem [#allocation7], %s991
          %993 = dma.done %s989, 2048
        $region60: #{tpu_custom_call.1} parent=55 // pred_fallthru
          _
        // Predicated region
        $region61: #{tpu_custom_call.1} parent=55 // pred_check
          %p994 = pneg %p139
        $region62: #{tpu_custom_call.1} parent=55 // pred_check_branch
          %996 = sbr.rel (%p994) target = $region64
        $region63: #{tpu_custom_call.1} parent=55 // pred_region
          %s997 = sand.u32 %s27, 1
          %s998 = scalar_lea.sflag [#allocation9], %s997
          %s999 = sand.u32 %s124, 1
          %s1000 = smul.addr %s999, 8
          %s1001 = scalar_lea.vmem [#allocation8], %s1000
          %1002 = dma.done %s998, 128
        $region64: #{tpu_custom_call.1} parent=55 // pred_fallthru
          _
        // Predicated region
        $region65: #{tpu_custom_call.1} parent=55 // pred_check
          %p1003 = pneg %p165
        $region66: #{tpu_custom_call.1} parent=55 // pred_check_branch
          %1005 = sbr.rel (%p1003) target = $region68
        $region67: #{tpu_custom_call.1} parent=55 // pred_region
          %s1006 = sand.u32 %s27, 1
          %s1007 = scalar_lea.sflag [#allocation9], %s1006
          %s1008 = sand.u32 %s150, 1
          %s1009 = smul.addr %s1008, 8
          %s1010 = scalar_lea.vmem [#allocation10], %s1009
          %1011 = dma.done %s1007, 128
        $region68: #{tpu_custom_call.1} parent=55 // pred_fallthru
          _
      $region56: #{tpu_custom_call.1} parent=5 // pred_fallthru
        _
    $region6: #{tpu_custom_call.1} parent=1 // loop_footer
      %s25 = sadd.s32 1, %s21
    $region7: #{tpu_custom_call.1} parent=1 // loop_footer_branch
      %20 = sbr.rel target = $region3
    $region8: #{tpu_custom_call.1} parent=1 // loop_exit
      _
    %1012 = vsyncpa [#allocation3], 1
    %s1013 = scalar_lea.sflag [#allocation3], 1
    %1014 = vsyncpa %s1013, 1
    %1015 = vsyncpa [#allocation6], 1
    %1016 = vsyncpa [#allocation4], 1
    %s1017 = scalar_lea.sflag [#allocation4], 1
    %1018 = vsyncpa %s1017, 1
    %1019 = vsyncpa [#allocation9], 1
    %s1020 = scalar_lea.sflag [#allocation9], 1
    %1021 = vsyncpa %s1020, 1

</llo_original>
